<compile_context>
chip_gen: v6e
topology: v6e:2x2x1
jax: 0.10.0
libtpu: 0.0.40
codegen_flags: <defaults>
</compile_context>

<pallas_src>
import functools

import jax
import jax.numpy as jnp
from jax.experimental import pallas as pl
from jax.experimental.pallas import tpu as pltpu


def _round_up(x, m):
    return ((x + m - 1) // m) * m


def _cdiv(a, b):
    return -(-a // b)


def actor_kernel(s_ref, w1_ref, w2_ref, w3_ref, out_ref):
    # Fused 3-layer MLP on one batch tile, entirely in VMEM:
    # three MXU matmuls with f32 accumulation + f32 tanh on the VPU/EUP
    # (f32 tanh is required on v5e and harmless on v6e/v7x).
    x = s_ref[...]
    h = jnp.tanh(
        jnp.dot(x, w1_ref[...], preferred_element_type=jnp.float32)
    )
    h = jnp.tanh(
        jnp.dot(h.astype(w2_ref.dtype), w2_ref[...],
                preferred_element_type=jnp.float32)
    )
    mean = jnp.tanh(
        jnp.dot(h.astype(w3_ref.dtype), w3_ref[...],
                preferred_element_type=jnp.float32)
    )
    out_ref[...] = mean.astype(out_ref.dtype)


@functools.partial(jax.jit, static_argnames=("tb",))
def actor_forward(s, w1, w2, w3, *, tb=2048):
    """s: (B, s_dim); w1: (s_dim, hidden); w2: (hidden, hidden); w3: (hidden, a_dim).

    Weight dtype drives the MXU input dtype: pass bf16 weights (pre-cast once,
    outside this function) for bf16 DMA/MXU I/O on v6e/v7x; accumulation and
    tanh stay f32 either way.
    """
    B, s_dim = s.shape
    hidden = w1.shape[1]
    a_dim = w3.shape[1]
    out_dtype = s.dtype
    io_dtype = w1.dtype

    # Sublane multiple for the activation tiles (f32 -> 8, bf16 -> 16).
    sub = 8 if jnp.dtype(io_dtype).itemsize >= 4 else 16

    # Tile-count-first sizing: last tile is nearly full, and we guarantee
    # >= 2 tiles (v7x megacore) whenever the batch is big enough to split.
    n_tiles = max(1, _cdiv(B, tb))
    if B >= 2 * sub:
        n_tiles = max(n_tiles, 2)
    tb_eff = _round_up(_cdiv(B, n_tiles), sub)
    Bp = tb_eff * n_tiles

    sp = s.astype(io_dtype)
    if Bp != B:
        # Batch-only zero pad (exact: tanh(0 @ W) rows are sliced off below).
        sp = jnp.pad(sp, ((0, Bp - B), (0, 0)))

    out = pl.pallas_call(
        actor_kernel,
        out_shape=jax.ShapeDtypeStruct((Bp, a_dim), out_dtype),
        grid_spec=pltpu.PrefetchScalarGridSpec(
            num_scalar_prefetch=0,
            grid=(n_tiles,),
            in_specs=[
                # Batch tile; feature dims are full-extent (legal: block dims
                # that equal the full array dims bypass the (8,128) rule).
                pl.BlockSpec((tb_eff, s_dim), lambda i: (i, 0)),
                # Weights: full-extent blocks, constant index_map -> resident
                # in VMEM across all batch tiles.
                pl.BlockSpec((s_dim, hidden), lambda i: (0, 0)),
                pl.BlockSpec((hidden, hidden), lambda i: (0, 0)),
                pl.BlockSpec((hidden, a_dim), lambda i: (0, 0)),
            ],
            out_specs=pl.BlockSpec((tb_eff, a_dim), lambda i: (i, 0)),
        ),
        compiler_params=pltpu.CompilerParams(
            # Independent batch tiles -> megacore sharding on v7x.
            dimension_semantics=("parallel",),
        ),
    )(sp, w1, w2, w3)

    return out if Bp == B else out[:B]


def init_actor_params(key, s_dim, a_dim, hidden, dtype=jnp.float32):
    """Matches init_linear: all Linear weights ~ N(0, 0.01); log_std = ones(a_dim)."""
    k1, k2, k3 = jax.random.split(key, 3)
    std = 0.01
    w1 = std * jax.random.normal(k1, (s_dim, hidden), dtype=dtype)   # Linear(s_dim -> hidden)
    w2 = std * jax.random.normal(k2, (hidden, hidden), dtype=dtype)  # Linear(hidden -> hidden)
    w3 = std * jax.random.normal(k3, (hidden, a_dim), dtype=dtype)   # Linear(hidden -> a_dim)
    log_std = jnp.ones((a_dim,), dtype=dtype)  # std = exp(log_std); not part of forward output
    return w1, w2, w3, log_std


def actor_forward_ref(s, w1, w2, w3):
    # Pure-JAX reference for correctness checking.
    h = jnp.tanh(s @ w1)
    h = jnp.tanh(h @ w2)
    return jnp.tanh(h @ w3)


if __name__ == "__main__":
    key = jax.random.PRNGKey(0)

    # Small shapes consistent with the module: state dim, action dim, hidden width.
    batch, s_dim, a_dim, hidden = 8, 16, 4, 32

    k_s, k_p, k_s2 = jax.random.split(key, 3)
    s = jax.random.normal(k_s, (batch, s_dim), dtype=jnp.float32)
    w1, w2, w3, log_std = init_actor_params(k_p, s_dim, a_dim, hidden)

    # f32 path, tiny batch -> single tile, no padding, no post-slice.
    mean = jax.block_until_ready(actor_forward(s, w1, w2, w3))
    ref = actor_forward_ref(s, w1, w2, w3)
    assert mean.shape == (batch, a_dim)
    assert jnp.allclose(mean, ref, atol=1e-5, rtol=1e-5)

    # f32 path, ragged multi-tile batch: 600 rows -> 2 tiles of 304 (8 pad rows),
    # exercising the batch grid + megacore-friendly >=2 tiles.
    batch2 = 600
    s2 = jax.random.normal(k_s2, (batch2, s_dim), dtype=jnp.float32)
    mean2 = jax.block_until_ready(actor_forward(s2, w1, w2, w3, tb=512))
    ref2 = actor_forward_ref(s2, w1, w2, w3)
    assert mean2.shape == (batch2, a_dim)
    assert jnp.allclose(mean2, ref2, atol=1e-5, rtol=1e-5)

    # bf16-I/O path (v6e/v7x HBM-traffic halving): weights cast ONCE outside
    # the forward wrapper; tanh stays f32 inside the kernel (v5e-safe).
    w1b, w2b, w3b = (w.astype(jnp.bfloat16) for w in (w1, w2, w3))
    mean3 = jax.block_until_ready(actor_forward(s2, w1b, w2b, w3b, tb=512))
    assert mean3.shape == (batch2, a_dim)
    assert jnp.allclose(mean3, ref2, atol=2e-2, rtol=2e-2)

    print("KERNEL_OK")
</pallas_src>

<mosaic_0001>
module attributes {stable_mosaic.version = 11 : i64} {
  func.func @actor_kernel(%arg0: i32, %arg1: memref<8x16xf32, #tpu.memory_space<vmem>>, %arg2: memref<16x32xf32, #tpu.memory_space<vmem>>, %arg3: memref<32x32xf32, #tpu.memory_space<vmem>>, %arg4: memref<32x4xf32, #tpu.memory_space<vmem>>, %arg5: memref<8x4xf32, #tpu.memory_space<vmem>>) attributes {dimension_semantics = [#tpu.dimension_semantics<parallel>], iteration_bounds = array<i64: 1>, scalar_prefetch = 0 : i64, scratch_operands = 0 : i64, tpu.core_type = #tpu.core_type<tc>, window_params = [{transform_indices = @transform_0, window_bounds = array<i64: 8, 16>}, {pipeline_mode = #tpu.pipeline_mode<synchronous>, transform_indices = @transform_1, window_bounds = array<i64: 16, 32>}, {pipeline_mode = #tpu.pipeline_mode<synchronous>, transform_indices = @transform_2, window_bounds = array<i64: 32, 32>}, {pipeline_mode = #tpu.pipeline_mode<synchronous>, transform_indices = @transform_3, window_bounds = array<i64: 32, 4>}, {transform_indices = @transform_4, window_bounds = array<i64: 8, 4>}]} {
    %c0 = arith.constant 0 : index
    %c0_0 = arith.constant 0 : index
    %0 = vector.load %arg1[%c0, %c0_0] : memref<8x16xf32, #tpu.memory_space<vmem>>, vector<8x16xf32>
    %c0_1 = arith.constant 0 : index
    %c0_2 = arith.constant 0 : index
    %1 = vector.load %arg2[%c0_1, %c0_2] : memref<16x32xf32, #tpu.memory_space<vmem>>, vector<16x32xf32>
    %cst = arith.constant dense<0.000000e+00> : vector<8x32xf32>
    %2 = tpu.matmul %0, %1, %cst {dimension_numbers = #tpu.dot_dimension_numbers<[1], [0], [0], [1], [0, 0, 1, 1], [], []>} : vector<8x16xf32>, vector<16x32xf32>, vector<8x32xf32> -> vector<8x32xf32>
    %3 = math.tanh %2 : vector<8x32xf32>
    %c0_3 = arith.constant 0 : index
    %c0_4 = arith.constant 0 : index
    %4 = vector.load %arg3[%c0_3, %c0_4] : memref<32x32xf32, #tpu.memory_space<vmem>>, vector<32x32xf32>
    %cst_5 = arith.constant dense<0.000000e+00> : vector<8x32xf32>
    %5 = tpu.matmul %3, %4, %cst_5 {dimension_numbers = #tpu.dot_dimension_numbers<[1], [0], [0], [1], [0, 0, 1, 1], [], []>} : vector<8x32xf32>, vector<32x32xf32>, vector<8x32xf32> -> vector<8x32xf32>
    %6 = math.tanh %5 : vector<8x32xf32>
    %c0_6 = arith.constant 0 : index
    %c0_7 = arith.constant 0 : index
    %7 = vector.load %arg4[%c0_6, %c0_7] : memref<32x4xf32, #tpu.memory_space<vmem>>, vector<32x4xf32>
    %cst_8 = arith.constant dense<0.000000e+00> : vector<8x4xf32>
    %8 = tpu.matmul %6, %7, %cst_8 {dimension_numbers = #tpu.dot_dimension_numbers<[1], [0], [0], [1], [0, 0, 1, 1], [], []>} : vector<8x32xf32>, vector<32x4xf32>, vector<8x4xf32> -> vector<8x4xf32>
    %9 = math.tanh %8 : vector<8x4xf32>
    %c0_9 = arith.constant 0 : index
    %c0_10 = arith.constant 0 : index
    %10 = vector.load %arg5[%c0_9, %c0_10] : memref<8x4xf32, #tpu.memory_space<vmem>>, vector<8x4xf32>
    tpu.vector_store %arg5[%c0_9, %c0_10], %9 {strides = array<i32>} : memref<8x4xf32, #tpu.memory_space<vmem>>, vector<8x4xf32>,
    return
  }
  func.func @transform_0(%arg0: i32) -> (i32, i32) {
    %c0_i32 = arith.constant 0 : i32
    %c0_i32_0 = arith.constant 0 : i32
    return %arg0, %c0_i32 : i32, i32
  }
  func.func @transform_1(%arg0: i32) -> (i32, i32) {
    %c0_i32 = arith.constant 0 : i32
    %c0_i32_0 = arith.constant 0 : i32
    %c0_i32_1 = arith.constant 0 : i32
    return %c0_i32, %c0_i32_0 : i32, i32
  }
  func.func @transform_2(%arg0: i32) -> (i32, i32) {
    %c0_i32 = arith.constant 0 : i32
    %c0_i32_0 = arith.constant 0 : i32
    %c0_i32_1 = arith.constant 0 : i32
    return %c0_i32, %c0_i32_0 : i32, i32
  }
  func.func @transform_3(%arg0: i32) -> (i32, i32) {
    %c0_i32 = arith.constant 0 : i32
    %c0_i32_0 = arith.constant 0 : i32
    %c0_i32_1 = arith.constant 0 : i32
    return %c0_i32, %c0_i32_0 : i32, i32
  }
  func.func @transform_4(%arg0: i32) -> (i32, i32) {
    %c0_i32 = arith.constant 0 : i32
    %c0_i32_0 = arith.constant 0 : i32
    return %arg0, %c0_i32 : i32, i32
  }
}

</mosaic_0001>

<llo_original>
// kernel: actor_forward.1
$region0: #{actor_forward.1}
  #allocation0 [shape = 'u32[]', space=smem, size = 0x4, offset = 0x4, fixed_abs, tag = 'smem constant byte address 0x4 - core index']
  #allocation1 [shape = 'u32[144,128]{1,0:T(1,128)}', space=vmem, size = 0x12000, scoped, tag = 'internal scratch']
  %s0 = inlined_call_operand.hbm [shape: f32[8,16], index: 0, kind: input, shape index: {}]
  %s1 = inlined_call_operand.hbm [shape: f32[16,32], index: 1, kind: input, shape index: {}]
  %s2 = inlined_call_operand.vmem [shape: f32[32,32], index: 2, kind: input, shape index: {}]
  %s3 = inlined_call_operand.vmem [shape: f32[32,4], index: 3, kind: input, shape index: {}]
  %s4 = inlined_call_operand.vmem [shape: f32[8,4], index: 4, kind: output, shape index: {}]
  %s5 = sld [smem:[#allocation0]]
  $region34: #{actor_forward.1} parent=0
    _
  %s7 = ssub.s32 1, %s5
  %s8 = scalar_select 0, %s7, %s5
  $region1: #{actor_forward.1} parent=0
    #allocation2 [shape = 'u8[4096]{0}', space=vmem, size = 0x1000, scoped, tag = 'input window, operand 0, single buffered']
    #allocation3 [shape = 's32[1]{0}', space=sflag, size = 0x4, scoped, tag = 'scoped memory for actor_forward.1']
    #allocation4 [shape = 'u8[8192]{0}', space=vmem, size = 0x2000, scoped, tag = 'input window, operand 1, single buffered']
    #allocation5 [shape = 's32[1]{0}', space=sflag, size = 0x4, scoped, tag = 'scoped memory for actor_forward.1']
    %9 = vsyncpa [#allocation3], 0
    %10 = vsyncpa [#allocation5], 0
    // Predicated region
    $region2: #{actor_forward.1} parent=1 // pred_check
      _
    $region3: #{actor_forward.1} parent=1 // pred_check_branch
      %12 = sbr.rel (0) target = $region5
    $region4: #{actor_forward.1} parent=1 // pred_region
      %s14 = ssub.s32 128, 128
      %15 = vsyncadd [#allocation3], %s14
      %s17 = sshll.u32 [#allocation2], 4
      %s18 = int_to_ptr.vmem [resolvable:$true] %s17
      %20 = dma.hbm_to_vmem [thread:$0]  %s0, 128, %s18, [#allocation3]
    $region5: #{actor_forward.1} parent=1 // pred_fallthru
      _
    // Predicated region
    $region6: #{actor_forward.1} parent=1 // pred_check
      _
    $region7: #{actor_forward.1} parent=1 // pred_check_branch
      %22 = sbr.rel (0) target = $region9
    $region8: #{actor_forward.1} parent=1 // pred_region
      %s24 = ssub.s32 256, 256
      %25 = vsyncadd [#allocation5], %s24
      %s26 = sshll.u32 [#allocation4], 4
      %s27 = int_to_ptr.vmem [resolvable:$true] %s26
      %32 = dma.hbm_to_vmem [thread:$0]  %s1, 256, %s27, [#allocation5], 128, 128, 8
    $region9: #{actor_forward.1} parent=1 // pred_fallthru
      _
    // Predicated region
    $region10: #{actor_forward.1} parent=1 // pred_check
      _
    $region11: #{actor_forward.1} parent=1 // pred_check_branch
      %34 = sbr.rel (0) target = $region13
    $region12: #{actor_forward.1} parent=1 // pred_region
      _
    $region13: #{actor_forward.1} parent=1 // pred_fallthru
      _
    // Predicated region
    $region14: #{actor_forward.1} parent=1 // pred_check
      _
    $region15: #{actor_forward.1} parent=1 // pred_check_branch
      %36 = sbr.rel (0) target = $region17
    $region16: #{actor_forward.1} parent=1 // pred_region
      _
    $region17: #{actor_forward.1} parent=1 // pred_fallthru
      _
    // Predicated region
    $region18: #{actor_forward.1} parent=1 // pred_check
      _
    $region19: #{actor_forward.1} parent=1 // pred_check_branch
      %38 = sbr.rel (0) target = $region21
    $region20: #{actor_forward.1} parent=1 // pred_region
      %39 = dma.done [#allocation3], 128
    $region21: #{actor_forward.1} parent=1 // pred_fallthru
      _
    // Predicated region
    $region22: #{actor_forward.1} parent=1 // pred_check
      _
    $region23: #{actor_forward.1} parent=1 // pred_check_branch
      %41 = sbr.rel (0) target = $region25
    $region24: #{actor_forward.1} parent=1 // pred_region
      %42 = dma.done [#allocation5], 256
    $region25: #{actor_forward.1} parent=1 // pred_fallthru
      _
    %v43 = vld [vmem:[#allocation2] sm:$0xff]
    %v44 = vld [vmem:[#allocation4] sm:$0xff]
    %v45 = vld [vmem:[#allocation4 + $0x8] sm:$0xff]
    %vm46 = vcmask 130048
    %v48 = vsel %vm46, %v43, 0
    %50 = vmatprep.subr.mxu0 0.0
    %51 = vmatpush1.msra.mxu0 0.0
    %52 = vmatprep.subr.mxu0 0.0
    %53 = vmatpush1.msra.mxu0 0.0
    %54 = vmatprep.subr.mxu0 0.0
    %55 = vmatpush1.msra.mxu0 0.0
    %56 = vmatprep.subr.mxu0 0.0
    %57 = vmatpush1.msra.mxu0 0.0
    %58 = vmatprep.subr.mxu0 0.0
    %59 = vmatpush1.msra.mxu0 0.0
    %60 = vmatprep.subr.mxu0 0.0
    %61 = vmatpush1.msra.mxu0 0.0
    %62 = vmatprep.subr.mxu0 0.0
    %63 = vmatpush1.msra.mxu0 0.0
    %64 = vmatprep.subr.mxu0 0.0
    %65 = vmatpush1.msra.mxu0 0.0
    %66 = vmatprep.subr.mxu0 0.0
    %67 = vmatpush1.msra.mxu0 0.0
    %68 = vmatprep.subr.mxu0 0.0
    %69 = vmatpush1.msra.mxu0 0.0
    %70 = vmatprep.subr.mxu0 0.0
    %71 = vmatpush1.msra.mxu0 0.0
    %72 = vmatprep.subr.mxu0 0.0
    %73 = vmatpush1.msra.mxu0 0.0
    %74 = vmatprep.subr.mxu0 0.0
    %75 = vmatpush1.msra.mxu0 0.0
    %76 = vmatprep.subr.mxu0 0.0
    %77 = vmatpush1.msra.mxu0 0.0
    %78 = vmatprep.subr.mxu0 0.0
    %79 = vmatpush1.msra.mxu0 %v45
    %80 = vmatprep.subr.mxu0 0.0
    %81 = vmatpush1.msra.mxu0 %v44
    %82 = vmatprep.subr.mxu0 0.0
    %83 = vmatpush2.msra.mxu0 0.0
    %84 = vmatprep.subr.mxu0 0.0
    %85 = vmatpush2.msra.mxu0 0.0
    %86 = vmatprep.subr.mxu0 0.0
    %87 = vmatpush2.msra.mxu0 0.0
    %88 = vmatprep.subr.mxu0 0.0
    %89 = vmatpush2.msra.mxu0 0.0
    %90 = vmatprep.subr.mxu0 0.0
    %91 = vmatpush2.msra.mxu0 0.0
    %92 = vmatprep.subr.mxu0 0.0
    %93 = vmatpush2.msra.mxu0 0.0
    %94 = vmatprep.subr.mxu0 0.0
    %95 = vmatpush2.msra.mxu0 0.0
    %96 = vmatprep.subr.mxu0 0.0
    %97 = vmatpush2.msra.mxu0 0.0
    %98 = vmatprep.subr.mxu0 0.0
    %99 = vmatpush2.msra.mxu0 0.0
    %100 = vmatprep.subr.mxu0 0.0
    %101 = vmatpush2.msra.mxu0 0.0
    %102 = vmatprep.subr.mxu0 0.0
    %103 = vmatpush2.msra.mxu0 0.0
    %104 = vmatprep.subr.mxu0 0.0
    %105 = vmatpush2.msra.mxu0 0.0
    %106 = vmatprep.subr.mxu0 0.0
    %107 = vmatpush2.msra.mxu0 0.0
    %108 = vmatprep.subr.mxu0 0.0
    %109 = vmatpush2.msra.mxu0 0.0
    %110 = vmatprep.subr.mxu0 0.0
    %111 = vmatpush2.msra.mxu0 0.0
    %112 = vmatprep.subr.mxu0 0.0
    %113 = vmatpush2.msra.mxu0 0.0
    %114 = vmatprep.mubr.f32.mxu0 0.0
    %115 = vmatmul.mubr.f32.gmra.mxu0 %v48
    %v116 = vpop.f32.mrf.mxu0
    %v117 = vadd.f32 0.0, %v116
    %v118 = vpop.f32.mrf.mxu0
    %119 = vdwg.mxu0
    %v120 = vtanh.pop %v117
    %v121 = vld [vmem:[%s2] sm:$0xff]
    %v122 = vld [vmem:[%s2 + $0x8] sm:$0xff]
    %v123 = vld [vmem:[%s2 + $0x10] sm:$0xff]
    %v124 = vld [vmem:[%s2 + $0x18] sm:$0xff]
    %vm125 = vcmask 261120
    %v127 = vsel %vm125, %v120, 0
    %129 = vmatprep.subr.mxu0 0.0
    %130 = vmatpush1.msra.mxu0 0.0
    %131 = vmatprep.subr.mxu0 0.0
    %132 = vmatpush1.msra.mxu0 0.0
    %133 = vmatprep.subr.mxu0 0.0
    %134 = vmatpush1.msra.mxu0 0.0
    %135 = vmatprep.subr.mxu0 0.0
    %136 = vmatpush1.msra.mxu0 0.0
    %137 = vmatprep.subr.mxu0 0.0
    %138 = vmatpush1.msra.mxu0 0.0
    %139 = vmatprep.subr.mxu0 0.0
    %140 = vmatpush1.msra.mxu0 0.0
    %141 = vmatprep.subr.mxu0 0.0
    %142 = vmatpush1.msra.mxu0 0.0
    %143 = vmatprep.subr.mxu0 0.0
    %144 = vmatpush1.msra.mxu0 0.0
    %145 = vmatprep.subr.mxu0 0.0
    %146 = vmatpush1.msra.mxu0 0.0
    %147 = vmatprep.subr.mxu0 0.0
    %148 = vmatpush1.msra.mxu0 0.0
    %149 = vmatprep.subr.mxu0 0.0
    %150 = vmatpush1.msra.mxu0 0.0
    %151 = vmatprep.subr.mxu0 0.0
    %152 = vmatpush1.msra.mxu0 0.0
    %153 = vmatprep.subr.mxu0 0.0
    %154 = vmatpush1.msra.mxu0 %v124
    %155 = vmatprep.subr.mxu0 0.0
    %156 = vmatpush1.msra.mxu0 %v123
    %157 = vmatprep.subr.mxu0 0.0
    %158 = vmatpush1.msra.mxu0 %v122
    %159 = vmatprep.subr.mxu0 0.0
    %160 = vmatpush1.msra.mxu0 %v121
    %161 = vmatprep.subr.mxu0 0.0
    %162 = vmatpush2.msra.mxu0 0.0
    %163 = vmatprep.subr.mxu0 0.0
    %164 = vmatpush2.msra.mxu0 0.0
    %165 = vmatprep.subr.mxu0 0.0
    %166 = vmatpush2.msra.mxu0 0.0
    %167 = vmatprep.subr.mxu0 0.0
    %168 = vmatpush2.msra.mxu0 0.0
    %169 = vmatprep.subr.mxu0 0.0
    %170 = vmatpush2.msra.mxu0 0.0
    %171 = vmatprep.subr.mxu0 0.0
    %172 = vmatpush2.msra.mxu0 0.0
    %173 = vmatprep.subr.mxu0 0.0
    %174 = vmatpush2.msra.mxu0 0.0
    %175 = vmatprep.subr.mxu0 0.0
    %176 = vmatpush2.msra.mxu0 0.0
    %177 = vmatprep.subr.mxu0 0.0
    %178 = vmatpush2.msra.mxu0 0.0
    %179 = vmatprep.subr.mxu0 0.0
    %180 = vmatpush2.msra.mxu0 0.0
    %181 = vmatprep.subr.mxu0 0.0
    %182 = vmatpush2.msra.mxu0 0.0
    %183 = vmatprep.subr.mxu0 0.0
    %184 = vmatpush2.msra.mxu0 0.0
    %185 = vmatprep.subr.mxu0 0.0
    %186 = vmatpush2.msra.mxu0 0.0
    %187 = vmatprep.subr.mxu0 0.0
    %188 = vmatpush2.msra.mxu0 0.0
    %189 = vmatprep.subr.mxu0 0.0
    %190 = vmatpush2.msra.mxu0 0.0
    %191 = vmatprep.subr.mxu0 0.0
    %192 = vmatpush2.msra.mxu0 0.0
    %193 = vmatprep.mubr.f32.mxu0 0.0
    %194 = vmatmul.mubr.f32.gmra.mxu0 %v127
    %v195 = vpop.f32.mrf.mxu0
    %v196 = vadd.f32 0.0, %v195
    %v197 = vpop.f32.mrf.mxu0
    %198 = vdwg.mxu0
    %v199 = vtanh.pop %v196
    %v200 = vld [vmem:[%s3] sm:$0xff]
    %v201 = vld [vmem:[%s3 + $0x8] sm:$0xff]
    %v202 = vld [vmem:[%s3 + $0x10] sm:$0xff]
    %v203 = vld [vmem:[%s3 + $0x18] sm:$0xff]
    %v205 = vsel %vm125, %v199, 0
    %207 = vmatprep.subr.mxu0 0.0
    %208 = vmatpush1.msra.mxu0 0.0
    %209 = vmatprep.subr.mxu0 0.0
    %210 = vmatpush1.msra.mxu0 0.0
    %211 = vmatprep.subr.mxu0 0.0
    %212 = vmatpush1.msra.mxu0 0.0
    %213 = vmatprep.subr.mxu0 0.0
    %214 = vmatpush1.msra.mxu0 0.0
    %215 = vmatprep.subr.mxu0 0.0
    %216 = vmatpush1.msra.mxu0 0.0
    %217 = vmatprep.subr.mxu0 0.0
    %218 = vmatpush1.msra.mxu0 0.0
    %219 = vmatprep.subr.mxu0 0.0
    %220 = vmatpush1.msra.mxu0 0.0
    %221 = vmatprep.subr.mxu0 0.0
    %222 = vmatpush1.msra.mxu0 0.0
    %223 = vmatprep.subr.mxu0 0.0
    %224 = vmatpush1.msra.mxu0 0.0
    %225 = vmatprep.subr.mxu0 0.0
    %226 = vmatpush1.msra.mxu0 0.0
    %227 = vmatprep.subr.mxu0 0.0
    %228 = vmatpush1.msra.mxu0 0.0
    %229 = vmatprep.subr.mxu0 0.0
    %230 = vmatpush1.msra.mxu0 0.0
    %231 = vmatprep.subr.mxu0 0.0
    %232 = vmatpush1.msra.mxu0 %v203
    %233 = vmatprep.subr.mxu0 0.0
    %234 = vmatpush1.msra.mxu0 %v202
    %235 = vmatprep.subr.mxu0 0.0
    %236 = vmatpush1.msra.mxu0 %v201
    %237 = vmatprep.subr.mxu0 0.0
    %238 = vmatpush1.msra.mxu0 %v200
    %239 = vmatprep.subr.mxu0 0.0
    %240 = vmatpush2.msra.mxu0 0.0
    %241 = vmatprep.subr.mxu0 0.0
    %242 = vmatpush2.msra.mxu0 0.0
    %243 = vmatprep.subr.mxu0 0.0
    %244 = vmatpush2.msra.mxu0 0.0
    %245 = vmatprep.subr.mxu0 0.0
    %246 = vmatpush2.msra.mxu0 0.0
    %247 = vmatprep.subr.mxu0 0.0
    %248 = vmatpush2.msra.mxu0 0.0
    %249 = vmatprep.subr.mxu0 0.0
    %250 = vmatpush2.msra.mxu0 0.0
    %251 = vmatprep.subr.mxu0 0.0
    %252 = vmatpush2.msra.mxu0 0.0
    %253 = vmatprep.subr.mxu0 0.0
    %254 = vmatpush2.msra.mxu0 0.0
    %255 = vmatprep.subr.mxu0 0.0
    %256 = vmatpush2.msra.mxu0 0.0
    %257 = vmatprep.subr.mxu0 0.0
    %258 = vmatpush2.msra.mxu0 0.0
    %259 = vmatprep.subr.mxu0 0.0
    %260 = vmatpush2.msra.mxu0 0.0
    %261 = vmatprep.subr.mxu0 0.0
    %262 = vmatpush2.msra.mxu0 0.0
    %263 = vmatprep.subr.mxu0 0.0
    %264 = vmatpush2.msra.mxu0 0.0
    %265 = vmatprep.subr.mxu0 0.0
    %266 = vmatpush2.msra.mxu0 0.0
    %267 = vmatprep.subr.mxu0 0.0
    %268 = vmatpush2.msra.mxu0 0.0
    %269 = vmatprep.subr.mxu0 0.0
    %270 = vmatpush2.msra.mxu0 0.0
    %271 = vmatprep.mubr.f32.mxu0 0.0
    %272 = vmatmul.mubr.f32.gmra.mxu0 %v205
    %v273 = vpop.f32.mrf.mxu0
    %v274 = vadd.f32 0.0, %v273
    %v275 = vpop.f32.mrf.mxu0
    %276 = vdwg.mxu0
    %v277 = vtanh.pop %v274
    %vm278 = vcmask 31744
    %279 = vst.msk [vmem:[%s4] sm:$0xff] %vm278, %v277
    // Predicated region
    $region26: #{actor_forward.1} parent=1 // pred_check
      _
    $region27: #{actor_forward.1} parent=1 // pred_check_branch
      %281 = sbr.rel (0) target = $region29
    $region28: #{actor_forward.1} parent=1 // pred_region
      _
    $region29: #{actor_forward.1} parent=1 // pred_fallthru
      _
    // Predicated region
    $region30: #{actor_forward.1} parent=1 // pred_check
      _
    $region31: #{actor_forward.1} parent=1 // pred_check_branch
      %283 = sbr.rel (0) target = $region33
    $region32: #{actor_forward.1} parent=1 // pred_region
      _
    $region33: #{actor_forward.1} parent=1 // pred_fallthru
      _
    %284 = vsyncpa [#allocation3], 1
    %285 = vsyncpa [#allocation5], 1

</llo_original>
